<compile_context>
chip_gen: v6e
topology: v6e:2x2x1
jax: 0.10.0
libtpu: 0.0.40
codegen_flags: <defaults>
</compile_context>

<pallas_src>
import math

import numpy as np
import jax
import jax.numpy as jnp
from jax.experimental import pallas as pl
from jax.experimental.pallas import tpu as pltpu


def _encoder_map_copy_kernel(m_hbm, o_hbm):
    # Single direct HBM->HBM DMA of the whole parameter.
    # No VMEM staging, no grid steps, no per-tile overhead.
    def scoped(sem):
        cp = pltpu.make_async_copy(m_hbm, o_hbm, sem)
        cp.start()
        cp.wait()

    pl.run_scoped(scoped, pltpu.SemaphoreType.DMA(()))


def encoder_map_forward(M, *, materialize: bool = True):
    """Pallas equivalent of Encoder_map.forward(): returns M.

    materialize=False short-circuits the identity (returns M itself, zero HBM
    traffic) -- semantically identical to the PyTorch forward(), which returns
    the parameter object.  materialize=True produces a fresh HBM buffer via a
    single direct HBM->HBM DMA (no VMEM round trip, no tiling).
    """
    if not materialize:
        return M

    n_cell, n_spot = M.shape
    nbytes = n_cell * n_spot * jnp.dtype(M.dtype).itemsize

    return pl.pallas_call(
        _encoder_map_copy_kernel,
        out_shape=jax.ShapeDtypeStruct((n_cell, n_spot), M.dtype),
        # Raw HBM refs on both sides; the kernel issues the DMA itself.
        in_specs=[pl.BlockSpec(memory_space=pl.ANY)],
        out_specs=pl.BlockSpec(memory_space=pl.ANY),
        # Pure memory traffic: one read + one write of the whole matrix.
        cost_estimate=pl.CostEstimate(
            flops=0, transcendentals=0, bytes_accessed=2 * nbytes
        ),
    )(M)


def init_encoder_map_params(key, n_cell, n_spot, dtype=jnp.float32):
    """Deterministic xavier_uniform_ init matching torch.nn.init.xavier_uniform_."""
    # For a 2-D tensor: fan_in = n_spot, fan_out = n_cell.
    bound = math.sqrt(6.0 / (n_cell + n_spot))
    return jax.random.uniform(
        key, (n_cell, n_spot), dtype=dtype, minval=-bound, maxval=bound
    )


if __name__ == "__main__":
    key = jax.random.PRNGKey(0)

    # ---- Test 1: small aligned shape, single HBM->HBM DMA ----
    n_cell, n_spot = 16, 256
    M = init_encoder_map_params(key, n_cell, n_spot)
    M_np = np.asarray(M)
    out = jax.block_until_ready(encoder_map_forward(M))
    assert out.shape == (n_cell, n_spot)
    assert out.dtype == M.dtype
    assert np.array_equal(np.asarray(out), M_np)

    # ---- Test 2: unaligned shape (no (8,128) block constraint with pl.ANY) ----
    M2 = init_encoder_map_params(jax.random.PRNGKey(1), 30, 200)
    M2_np = np.asarray(M2)
    out2 = jax.block_until_ready(encoder_map_forward(M2))
    assert out2.shape == (30, 200)
    assert np.array_equal(np.asarray(out2), M2_np)

    # ---- Test 3: bf16 dtype preservation through the DMA copy ----
    M3 = init_encoder_map_params(jax.random.PRNGKey(2), 32, 384, dtype=jnp.bfloat16)
    M3_np = np.asarray(M3)
    out3 = jax.block_until_ready(encoder_map_forward(M3))
    assert out3.dtype == jnp.bfloat16
    assert np.array_equal(np.asarray(out3), M3_np)

    # ---- Test 4: identity short-circuit (zero HBM traffic, no kernel) ----
    out4 = encoder_map_forward(M, materialize=False)
    assert out4 is M
    assert np.array_equal(np.asarray(out4), M_np)

    print("KERNEL_OK")
</pallas_src>

<mosaic_0001>
module attributes {stable_mosaic.version = 11 : i64} {
  func.func @_encoder_map_copy_kernel(%arg0: memref<16x256xf32, #tpu.memory_space<any>>, %arg1: memref<16x256xf32, #tpu.memory_space<any>>) attributes {dimension_semantics = [], scalar_prefetch = 0 : i64, scratch_operands = 0 : i64, tpu.core_type = #tpu.core_type<tc>} {
    "tpu.region"() ({
      %0 = tpu.sem_alloc : memref<!tpu.dma_semaphore, #tpu.memory_space<semaphore_mem>>
      tpu.enqueue_dma source(%arg0 : memref<16x256xf32, #tpu.memory_space<any>>) target(%arg1 : memref<16x256xf32, #tpu.memory_space<any>>) target_semaphore(%0 : memref<!tpu.dma_semaphore, #tpu.memory_space<semaphore_mem>>)
      tpu.wait_dma2 semaphore(%0 : memref<!tpu.dma_semaphore, #tpu.memory_space<semaphore_mem>>) src(%arg0 : memref<16x256xf32, #tpu.memory_space<any>>) dst(%arg1 : memref<16x256xf32, #tpu.memory_space<any>>)
      tpu.yield
    }) : () -> ()
    return
  }
}

</mosaic_0001>

<llo_original>
// kernel: tpu_custom_call.1
$region0: #{tpu_custom_call.1}
  #allocation0 [shape = 'u32[]', space=smem, size = 0x4, offset = 0x4, fixed_abs, tag = 'smem constant byte address 0x4 - core index']
  #allocation1 [shape = 'u32[144,128]{1,0:T(1,128)}', space=vmem, size = 0x12000, scoped, tag = 'internal scratch']
  #allocation3 [shape = 's32[]', space=sflag, size = 0x4, offset = 0, fixed_abs, tag = 'sflag constant byte address 0x0 - dummy sync flag']
  #allocation4 [shape = 'u32[0]{0}', space=smem, size = 0, offset = 0, fixed_abs, tag = 'smem constant byte address 0x0 - null']
  %s0 = inlined_call_operand.hbm [shape: f32[16,256], index: 0, kind: input, shape index: {}]
  %s1 = inlined_call_operand.hbm [shape: f32[16,256], index: 1, kind: output, shape index: {}]
  %s2 = sld [smem:[#allocation0]]
  $region3: #{tpu_custom_call.1} parent=0
    _
  %s4 = ssub.s32 1, %s2
  %s5 = scalar_select 0, %s4, %s2
  $region2: #{tpu_custom_call.1} parent=0
    #allocation2 [shape = 's32[1]{0}', space=sflag, size = 0x4, scoped, tag = 'scoped memory for tpu_custom_call.1']
    %s7 = sshll.u32 1, 14
    %s8 = sxor.u32 4294967295, %s7
    %12 = dma.general %s0, 512, %s1, [#allocation2], 131072, [#allocation4], 0, 0
    %s13 = smul.u32 8, 2
    %s14 = smul.u32 %s13, 2
    %s15 = sshll.u32 %s14, 4
    %16 = dma.done [#allocation2], %s15

</llo_original>
